<compile_context>
chip_gen: v7x
topology: tpu7x:2x2x1
jax: 0.10.0
libtpu: 0.0.40
codegen_flags: <defaults>
</compile_context>

<pallas_src>
import jax
import jax.numpy as jnp
from jax.experimental import pallas as pl
from jax.experimental.pallas import tpu as pltpu

_LANES = 128
_HW_PARAMS_CACHE = None


def _hw_params():
    """(target_tile_bytes, vmem_limit_bytes_or_None, two_tensorcores) per TPU gen."""
    global _HW_PARAMS_CACHE
    if _HW_PARAMS_CACHE is not None:
        return _HW_PARAMS_CACHE

    tile_bytes = 2 * 1024 * 1024      # conservative default (v5e-safe)
    vmem_limit = None
    two_cores = False

    kind = ""
    try:
        kind = jax.devices()[0].device_kind.lower()
    except Exception:
        kind = ""

    if "v7" in kind:
        # 3.2 TB/s HBM: big tiles to amortize ~0.35us/step. 8 MiB tiles =>
        # 32 MiB working set (in+out, double-buffered) -> must raise the
        # 32 MiB scoped-VMEM default; stay well under 64 MiB physical.
        tile_bytes = 8 * 1024 * 1024
        vmem_limit = 48 * 1024 * 1024
        two_cores = True
    elif "v6" in kind:
        # 16 MiB working set fits the 32 MiB scoped default untouched.
        tile_bytes = 4 * 1024 * 1024
    elif "v5" in kind:
        # 8 MiB working set under the 16 MiB scoped default.
        tile_bytes = 2 * 1024 * 1024
    elif "v4" in kind:
        tile_bytes = 2 * 1024 * 1024
        two_cores = True  # megacore: 2 TensorCores

    # Sanity-cap any explicit VMEM limit against queried physical capacity.
    try:
        cap = int(pltpu.get_tpu_info().vmem_capacity_bytes)
        if vmem_limit is not None:
            vmem_limit = min(vmem_limit, max(cap - 16 * 1024 * 1024, cap // 2))
    except Exception:
        pass

    _HW_PARAMS_CACHE = (tile_bytes, vmem_limit, two_cores)
    return _HW_PARAMS_CACHE


def _tlu_kernel(t_ref, x_ref, o_ref):
    # Pure VPU elementwise clamp on a (block_rows, 128) VMEM tile.
    # t_ref is the scalar-prefetch SMEM threshold (hidden behind the HBM DMA).
    x = x_ref[...]
    t = t_ref[0].astype(x.dtype)
    o_ref[...] = jnp.clip(x, -t, t)


def _tlu_2d(x2d: jax.Array, t_arr: jax.Array) -> jax.Array:
    """Run the clamp kernel over a lane-dense (rows, 128) slab."""
    rows, _ = x2d.shape
    dtype = x2d.dtype
    itemsize = jnp.dtype(dtype).itemsize
    tile_bytes, vmem_limit, two_cores = _hw_params()

    # Packed sublane factor: f32 -> 8, bf16 -> 16, int8/fp8 -> 32
    # (keeps non-final blocks unmasked on store).
    sublane = max(8, 32 // itemsize)

    block_rows = max(sublane, tile_bytes // (_LANES * itemsize))
    block_rows = (block_rows // sublane) * sublane

    if two_cores and rows > sublane:
        # Ensure >= 2 grid steps so both TensorCores get a block via
        # dimension_semantics=("parallel",). Skipped on single-TC parts where
        # it would only add per-step overhead.
        half = -(-rows // 2)
        half_rows = -(-half // sublane) * sublane
        block_rows = min(block_rows, half_rows)

    block_rows = min(block_rows, rows)
    grid = (pl.cdiv(rows, block_rows),)

    cp_kwargs = dict(dimension_semantics=("parallel",))
    if vmem_limit is not None:
        cp_kwargs["vmem_limit_bytes"] = int(vmem_limit)

    return pl.pallas_call(
        _tlu_kernel,
        out_shape=jax.ShapeDtypeStruct((rows, _LANES), dtype),
        grid_spec=pltpu.PrefetchScalarGridSpec(
            num_scalar_prefetch=1,
            grid=grid,
            in_specs=[pl.BlockSpec((block_rows, _LANES), lambda i, t: (i, 0))],
            out_specs=pl.BlockSpec((block_rows, _LANES), lambda i, t: (i, 0)),
        ),
        compiler_params=pltpu.CompilerParams(**cp_kwargs),
    )(t_arr, x2d)


def tlu(x: jax.Array, threshold: float) -> jax.Array:
    """Elementwise clamp(x, -threshold, +threshold) via a Pallas TPU kernel."""
    # NOTE: semantics assume threshold >= 0 (as in StegNet); for threshold < 0
    # both torch.clamp and jnp.clip resolve min>max to the max bound.
    orig_shape = x.shape
    dtype = x.dtype
    n = x.size
    if n == 0:
        return x

    smem_dtype = jnp.float32 if jnp.issubdtype(dtype, jnp.floating) else jnp.int32
    t_arr = jnp.asarray([threshold], dtype=smem_dtype)
    t_same = t_arr[0].astype(dtype)  # for the tiny-tail fallback path

    flat = x.reshape(-1)
    n_main = (n // _LANES) * _LANES

    if n_main == 0:
        # Fewer than 128 elements total: kernel launch not worth it.
        return jnp.clip(flat, -t_same, t_same).reshape(orig_shape)

    if n_main == n:
        # Zero-copy fast path: size is a multiple of 128 lanes.
        out2d = _tlu_2d(flat.reshape(n_main // _LANES, _LANES), t_arr)
        return out2d.reshape(orig_shape)

    # Ragged size: kernel on the 128-aligned prefix, plain clip on the
    # (<128-element) tail; avoids the full-array pad + slice round trip.
    main = jax.lax.slice(flat, (0,), (n_main,))
    tail = jax.lax.slice(flat, (n_main,), (n,))
    out_main = _tlu_2d(main.reshape(n_main // _LANES, _LANES), t_arr).reshape(-1)
    out_tail = jnp.clip(tail, -t_same, t_same)
    return jnp.concatenate([out_main, out_tail]).reshape(orig_shape)


if __name__ == "__main__":
    key = jax.random.PRNGKey(0)
    threshold = 3.0

    # NCHW input, small shapes consistent with a conv-net feature map.
    x = jax.random.normal(key, (2, 4, 16, 16), dtype=jnp.float32) * 5.0
    out = jax.block_until_ready(tlu(x, threshold))
    ref = jnp.clip(x, -threshold, threshold)
    assert out.shape == x.shape and out.dtype == x.dtype
    assert jnp.allclose(out, ref), "TLU kernel mismatch vs reference clamp (aligned path)"

    # Ragged-size path (n % 128 != 0): aligned prefix via kernel + tail clip.
    key2 = jax.random.PRNGKey(1)
    x2 = jax.random.normal(key2, (2, 3, 67), dtype=jnp.float32) * 5.0
    out2 = jax.block_until_ready(tlu(x2, threshold))
    ref2 = jnp.clip(x2, -threshold, threshold)
    assert out2.shape == x2.shape and out2.dtype == x2.dtype
    assert jnp.allclose(out2, ref2), "TLU kernel mismatch vs reference clamp (ragged path)"

    print("KERNEL_OK")
</pallas_src>

<mosaic_0001>
module attributes {stable_mosaic.version = 11 : i64} {
  func.func @_tlu_kernel(%arg0: i32, %arg1: memref<1xf32, #tpu.memory_space<smem>>, %arg2: memref<16x128xf32, #tpu.memory_space<vmem>>, %arg3: memref<16x128xf32, #tpu.memory_space<vmem>>) attributes {dimension_semantics = [#tpu.dimension_semantics<parallel>], iteration_bounds = array<i64: 1>, scalar_prefetch = 1 : i64, scratch_operands = 0 : i64, tpu.core_type = #tpu.core_type<tc>, window_params = [{transform_indices = @transform_0, window_bounds = array<i64: 16, 128>}, {transform_indices = @transform_1, window_bounds = array<i64: 16, 128>}]} {
    %c0 = arith.constant 0 : index
    %c0_0 = arith.constant 0 : index
    %0 = vector.load %arg2[%c0, %c0_0] : memref<16x128xf32, #tpu.memory_space<vmem>>, vector<16x128xf32>
    %c0_1 = arith.constant 0 : index
    %1 = memref.load %arg1[%c0_1] : memref<1xf32, #tpu.memory_space<smem>>
    %cst = arith.constant 0.000000e+00 : f32
    %2 = arith.subf %cst, %1 : f32
    %3 = vector.broadcast %2 : f32 to vector<16x128xf32>
    %4 = arith.maximumf %3, %0 : vector<16x128xf32>
    %5 = vector.broadcast %1 : f32 to vector<16x128xf32>
    %6 = arith.minimumf %5, %4 : vector<16x128xf32>
    %c0_2 = arith.constant 0 : index
    %c0_3 = arith.constant 0 : index
    %7 = vector.load %arg3[%c0_2, %c0_3] : memref<16x128xf32, #tpu.memory_space<vmem>>, vector<16x128xf32>
    tpu.vector_store %arg3[%c0_2, %c0_3], %6 {strides = array<i32>} : memref<16x128xf32, #tpu.memory_space<vmem>>, vector<16x128xf32>,
    return
  }
  func.func @transform_0(%arg0: i32, %arg1: memref<1xf32, #tpu.memory_space<smem>>) -> (i32, i32) {
    %c0_i32 = arith.constant 0 : i32
    %c0_i32_0 = arith.constant 0 : i32
    return %arg0, %c0_i32 : i32, i32
  }
  func.func @transform_1(%arg0: i32, %arg1: memref<1xf32, #tpu.memory_space<smem>>) -> (i32, i32) {
    %c0_i32 = arith.constant 0 : i32
    %c0_i32_0 = arith.constant 0 : i32
    return %arg0, %c0_i32 : i32, i32
  }
}

</mosaic_0001>

<llo_original>
// kernel: tpu_custom_call.1
$region0: #{tpu_custom_call.1}
  #allocation0 [shape = 'u32[]', space=smem, size = 0x4, offset = 0x4, fixed_abs, tag = 'smem constant byte address 0x4 - core index']
  #allocation1 [shape = 'u32[144,128]{1,0:T(1,128)}', space=vmem, size = 0x12000, scoped, tag = 'internal scratch']
  #allocation2 [shape = 's32[1]{0}', space=sflag, size = 0x4, scoped, tag = 'scoped memory for tpu_custom_call.1']
  #allocation3 [shape = 'f32[1]{0:T(128)S(6)}', space=smem, size = 0x200, scoped, tag = 'prefetched SMEM operand 0']
  %s0 = inlined_call_operand.<no memory space> [shape: f32[1], index: 0, kind: input, shape index: {}]
  %s1 = inlined_call_operand.hbm [shape: f32[16,128], index: 1, kind: input, shape index: {}]
  %s2 = inlined_call_operand.hbm [shape: f32[16,128], index: 2, kind: output, shape index: {}]
  %s3 = sld [smem:[#allocation0]]
  $region18: #{tpu_custom_call.1} parent=0
    _
  %s5 = ssub.s32 1, %s3
  %s6 = scalar_select 0, %s5, %s3
  %7 = sst [smem:[#allocation3]] %s0
  $region1: #{tpu_custom_call.1} parent=0
    #allocation4 [shape = 'u8[8192]{0}', space=vmem, size = 0x2000, scoped, tag = 'input window, operand 1, single buffered']
    #allocation5 [shape = 's32[1]{0}', space=sflag, size = 0x4, scoped, tag = 'scoped memory for tpu_custom_call.1']
    #allocation6 [shape = 's32[1]{0}', space=sflag, size = 0x4, scoped, tag = 'scoped memory for tpu_custom_call.1']
    #allocation7 [shape = 'u8[8192]{0}', space=vmem, size = 0x2000, scoped, tag = 'output window, operand 0, single buffered']
    %8 = vsyncpa [#allocation5], 0
    %9 = vsyncpa [#allocation6], 0
    // Predicated region
    $region2: #{tpu_custom_call.1} parent=1 // pred_check
      _
    $region3: #{tpu_custom_call.1} parent=1 // pred_check_branch
      %11 = sbr.rel (0) target = $region5
    $region4: #{tpu_custom_call.1} parent=1 // pred_region
      %s13 = ssub.s32 256, 256
      %14 = vsyncadd [#allocation5], %s13
      %s15 = sshll.u32 [#allocation4], 4
      %s16 = int_to_ptr.vmem [resolvable:$true] %s15
      %21 = dma.hbm_to_vmem [thread:$0]  %s1, 256, %s16, [#allocation5], 128, 128, 8
    $region5: #{tpu_custom_call.1} parent=1 // pred_fallthru
      _
    // Predicated region
    $region6: #{tpu_custom_call.1} parent=1 // pred_check
      _
    $region7: #{tpu_custom_call.1} parent=1 // pred_check_branch
      %23 = sbr.rel (0) target = $region9
    $region8: #{tpu_custom_call.1} parent=1 // pred_region
      %24 = dma.done [#allocation5], 256
    $region9: #{tpu_custom_call.1} parent=1 // pred_fallthru
      _
    %v25 = vld [vmem:[#allocation4] sm:$0xff]
    %v26 = vld [vmem:[#allocation4 + $0x8] sm:$0xff]
    %s27 = sld [smem:[#allocation3]]
    %s28 = ssub.f32 0.0, %s27
    %v29 = vstv %s28
    %v30 = vmax.f32 %v29, %v25
    %v31 = vmax.f32 %v29, %v26
    %v32 = vstv %s27
    %v33 = vmin.f32 %v32, %v30
    %v34 = vmin.f32 %v32, %v31
    %35 = vst [vmem:[#allocation7] sm:$0xff] %v33
    %36 = vst [vmem:[#allocation7 + $0x8] sm:$0xff] %v34
    // Predicated region
    $region10: #{tpu_custom_call.1} parent=1 // pred_check
      _
    $region11: #{tpu_custom_call.1} parent=1 // pred_check_branch
      %38 = sbr.rel (0) target = $region13
    $region12: #{tpu_custom_call.1} parent=1 // pred_region
      %s40 = ssub.s32 256, 256
      %41 = vsyncadd [#allocation6], %s40
      %s42 = sshll.u32 [#allocation7], 4
      %s43 = int_to_ptr.vmem [resolvable:$true] %s42
      %48 = dma.vmem_to_hbm [thread:$0]  %s43, 256, %s2, [#allocation6], 128, 128, 8
    $region13: #{tpu_custom_call.1} parent=1 // pred_fallthru
      _
    // Predicated region
    $region14: #{tpu_custom_call.1} parent=1 // pred_check
      _
    $region15: #{tpu_custom_call.1} parent=1 // pred_check_branch
      %50 = sbr.rel (0) target = $region17
    $region16: #{tpu_custom_call.1} parent=1 // pred_region
      %51 = dma.done [#allocation6], 256
    $region17: #{tpu_custom_call.1} parent=1 // pred_fallthru
      _
    %52 = vsyncpa [#allocation5], 1
    %53 = vsyncpa [#allocation6], 1

</llo_original>
